<compile_context>
chip_gen: v5e
topology: v5e:2x2
jax: 0.10.0
libtpu: 0.0.40
codegen_flags: <defaults>
</compile_context>

<pallas_src>
import jax
import jax.numpy as jnp
from jax import lax
from jax.experimental import pallas as pl
from jax.experimental.pallas import tpu as pltpu

GROUP = 8  # labels per grid step -> (8, E_pad) full-sublane output tiles


def _round_up(x, m):
    return ((x + m - 1) // m) * m


def prepare_class_embedding_weight(weight, eps=1e-4):
    """Hoisted, once-per-weight-update preprocessing (plain XLA, cache the result).

    weight: (E, N) as in the PyTorch module (out_features, in_features).
    Returns (N, E_pad) f32: transposed, fully normalized and pre-scaled so that
    forward is just a row gather: out[b, :] = prepped[label_b, :E].
    """
    E, N = weight.shape
    w32 = weight.astype(jnp.float32)
    sqrt_n = jnp.sqrt(jnp.float32(N))
    row_norm = jnp.sqrt(jnp.sum(w32 * w32, axis=1, keepdims=True))          # (E, 1)
    # sqrt(N) (one-hot scale) folded with pixel_norm + 1/sqrt(fan_in):
    w_eff = w32 * (sqrt_n / (sqrt_n * jnp.float32(eps) + row_norm))         # (E, N)
    wT = jnp.transpose(w_eff)                                               # (N, E)
    E_pad = _round_up(E, 128)                                               # lane-dense
    if E_pad != E:
        wT = jnp.pad(wT, ((0, 0), (0, E_pad - E)))
    return wT.astype(jnp.float32)


def _gather_kernel(labels_ref, w_hbm, o_ref, gbuf, sems):
    """Pure pipelined gather of prepped weight rows.

    labels_ref: (B_pad,) int32 in SMEM (scalar prefetch).
    w_hbm:      (N, E_pad) f32 ref left in HBM (memory_space=pl.ANY).
    o_ref:      (GROUP, E_pad) f32 VMEM output block for this grid step.
    gbuf:       (2, GROUP, E_pad) f32 VMEM double buffer.
    sems:       (2, GROUP) DMA semaphores.
    """
    g = pl.program_id(0)
    ngroups = pl.num_programs(0)
    slot = lax.rem(g, 2)

    def fetch_group(group_idx, slot_idx):
        # 8 data-dependent row DMAs HBM -> VMEM (one per label in the group).
        for r in range(GROUP):
            lbl = labels_ref[group_idx * GROUP + r]                 # SMEM scalar read
            pltpu.make_async_copy(
                w_hbm.at[lbl], gbuf.at[slot_idx, r], sems.at[slot_idx, r]
            ).start()

    # Prime the pipeline on the first step.
    @pl.when(g == 0)
    def _():
        fetch_group(0, 0)

    # Prefetch the NEXT group into the other slot while this one is consumed.
    @pl.when(g + 1 < ngroups)
    def _():
        fetch_group(g + 1, 1 - slot)

    # Wait for this group's rows, then emit one full (8, E_pad) unmasked store.
    for r in range(GROUP):
        pltpu.make_async_copy(w_hbm.at[0], gbuf.at[slot, r], sems.at[slot, r]).wait()
    o_ref[...] = gbuf[slot]


def class_embedding_apply(class_labels, w_prepped, embedding_dim):
    """Forward pass given the cached, preprocessed weight (N, E_pad)."""
    labels = class_labels.reshape(-1).astype(jnp.int32)
    B = labels.shape[0]
    N, E_pad = w_prepped.shape
    B_pad = _round_up(max(B, 1), GROUP)

    # Keep gather addresses in range (F.one_hot would reject OOB labels anyway);
    # padded batch rows gather row 0 and are sliced off below.
    labels = jnp.clip(labels, 0, N - 1)
    if B_pad != B:
        labels = jnp.pad(labels, (0, B_pad - B))

    out = pl.pallas_call(
        _gather_kernel,
        out_shape=jax.ShapeDtypeStruct((B_pad, E_pad), jnp.float32),
        grid_spec=pltpu.PrefetchScalarGridSpec(
            num_scalar_prefetch=1,                       # labels -> SMEM
            grid=(B_pad // GROUP,),
            in_specs=[pl.BlockSpec(memory_space=pl.ANY)],  # weight stays in HBM
            out_specs=pl.BlockSpec((GROUP, E_pad), lambda g, lbl: (g, 0)),
            scratch_shapes=[
                pltpu.VMEM((2, GROUP, E_pad), jnp.float32),   # gather double buffer
                pltpu.SemaphoreType.DMA((2, GROUP)),
            ],
        ),
        compiler_params=pltpu.CompilerParams(
            dimension_semantics=("arbitrary",),          # cross-step prefetch chain
        ),
    )(labels, w_prepped)
    return out[:B, :embedding_dim]


def class_embedding(class_labels, weight, eps=1e-4):
    """Convenience one-shot API. For repeated calls, cache the prepared weight."""
    w_prepped = prepare_class_embedding_weight(weight, eps=eps)
    return class_embedding_apply(class_labels, w_prepped, weight.shape[0])


def class_embedding_ref(class_labels, weight, eps=1e-4):
    """Pure-JAX reference mirroring the PyTorch module (eval forward)."""
    labels = class_labels.reshape(-1)
    E, N = weight.shape
    onehot = jax.nn.one_hot(labels, N, dtype=jnp.float32) * jnp.sqrt(jnp.float32(N))
    norm = jnp.linalg.norm(weight.astype(jnp.float32), axis=1, keepdims=True)
    w_norm = weight / (eps + norm / jnp.sqrt(jnp.float32(N)))        # pixel_norm
    w = w_norm / jnp.sqrt(jnp.float32(N))                            # / sqrt(fan_in)
    return onehot @ w.T


if __name__ == "__main__":
    key = jax.random.PRNGKey(0)
    k_w, k_lbl = jax.random.split(key)

    num_embeddings = 16   # num classes
    embedding_dim = 32
    batch = 12            # pads to 16 -> 2 label groups (exercises double-buffering)

    # Deterministic synthetic parameters (module __init__: torch.randn(out, in)).
    weight = jax.random.normal(k_w, (embedding_dim, num_embeddings), dtype=jnp.float32)
    class_labels = jax.random.randint(k_lbl, (batch,), 0, num_embeddings, dtype=jnp.int32)

    # Preprocess once (cached across forward calls), then run the gather kernel.
    w_prepped = jax.block_until_ready(prepare_class_embedding_weight(weight, eps=1e-4))
    out = jax.block_until_ready(class_embedding_apply(class_labels, w_prepped, embedding_dim))
    ref = class_embedding_ref(class_labels, weight, eps=1e-4)

    assert out.shape == (batch, embedding_dim)
    assert jnp.allclose(out, ref, atol=1e-5, rtol=1e-5), "mismatch vs reference"

    print("KERNEL_OK")
</pallas_src>

<mosaic_0001>
module attributes {stable_mosaic.version = 11 : i64} {
  func.func @_gather_kernel(%arg0: i32, %arg1: memref<16xi32, #tpu.memory_space<smem>>, %arg2: memref<16x128xf32, #tpu.memory_space<any>>, %arg3: memref<8x128xf32, #tpu.memory_space<vmem>>, %arg4: memref<2x8x128xf32, #tpu.memory_space<vmem>>, %arg5: memref<2x8x!tpu.dma_semaphore, #tpu.memory_space<semaphore_mem>>) attributes {dimension_semantics = [#tpu.dimension_semantics<arbitrary>], iteration_bounds = array<i64: 2>, scalar_prefetch = 1 : i64, scratch_operands = 2 : i64, tpu.core_type = #tpu.core_type<tc>, window_params = [{}, {transform_indices = @transform_1, window_bounds = array<i64: 8, 128>}]} {
    %c2_i32 = arith.constant 2 : i32
    %0 = arith.remsi %arg0, %c2_i32 : i32
    %c0_i32 = arith.constant 0 : i32
    %1 = arith.cmpi eq, %arg0, %c0_i32 : i32
    %2 = arith.extui %1 : i1 to i32
    %c0_i32_0 = arith.constant 0 : i32
    %3 = arith.cmpi ne, %2, %c0_i32_0 : i32
    scf.if %3 {
      %c0_41 = arith.constant 0 : index
      %60 = memref.load %arg1[%c0_41] : memref<16xi32, #tpu.memory_space<smem>>
      %c0_i32_42 = arith.constant 0 : i32
      %c0_i32_43 = arith.constant 0 : i32
      %c0_i32_44 = arith.constant 0 : i32
      %c0_i32_45 = arith.constant 0 : i32
      %c0_i32_46 = arith.constant 0 : i32
      %61 = tpu.memref_slice %arg2[%60, %c0_i32_46] : memref<16x128xf32, #tpu.memory_space<any>> -> memref<1x128xf32, #tpu.memory_space<any>>
      %62 = tpu.memref_squeeze %61 : memref<1x128xf32, #tpu.memory_space<any>> -> memref<128xf32, #tpu.memory_space<any>>
      %c0_i32_47 = arith.constant 0 : i32
      %63 = tpu.memref_slice %arg4[%c0_i32_42, %c0_i32_43, %c0_i32_47] : memref<2x8x128xf32, #tpu.memory_space<vmem>> -> memref<1x1x128xf32, #tpu.memory_space<vmem>>
      %64 = tpu.memref_squeeze %63 : memref<1x1x128xf32, #tpu.memory_space<vmem>> -> memref<128xf32, #tpu.memory_space<vmem>>
      %65 = tpu.memref_slice %arg5[%c0_i32_44, %c0_i32_45] : memref<2x8x!tpu.dma_semaphore, #tpu.memory_space<semaphore_mem>> -> memref<1x1x!tpu.dma_semaphore, #tpu.memory_space<semaphore_mem>>
      %66 = tpu.memref_squeeze %65 : memref<1x1x!tpu.dma_semaphore, #tpu.memory_space<semaphore_mem>> -> memref<!tpu.dma_semaphore, #tpu.memory_space<semaphore_mem>>
      tpu.enqueue_dma source(%62 : memref<128xf32, #tpu.memory_space<any>>) target(%64 : memref<128xf32, #tpu.memory_space<vmem>>) target_semaphore(%66 : memref<!tpu.dma_semaphore, #tpu.memory_space<semaphore_mem>>)
      %c1 = arith.constant 1 : index
      %67 = memref.load %arg1[%c1] : memref<16xi32, #tpu.memory_space<smem>>
      %c0_i32_48 = arith.constant 0 : i32
      %c1_i32_49 = arith.constant 1 : i32
      %c0_i32_50 = arith.constant 0 : i32
      %c1_i32_51 = arith.constant 1 : i32
      %c0_i32_52 = arith.constant 0 : i32
      %68 = tpu.memref_slice %arg2[%67, %c0_i32_52] : memref<16x128xf32, #tpu.memory_space<any>> -> memref<1x128xf32, #tpu.memory_space<any>>
      %69 = tpu.memref_squeeze %68 : memref<1x128xf32, #tpu.memory_space<any>> -> memref<128xf32, #tpu.memory_space<any>>
      %c0_i32_53 = arith.constant 0 : i32
      %70 = tpu.memref_slice %arg4[%c0_i32_48, %c1_i32_49, %c0_i32_53] : memref<2x8x128xf32, #tpu.memory_space<vmem>> -> memref<1x1x128xf32, #tpu.memory_space<vmem>>
      %71 = tpu.memref_squeeze %70 : memref<1x1x128xf32, #tpu.memory_space<vmem>> -> memref<128xf32, #tpu.memory_space<vmem>>
      %72 = tpu.memref_slice %arg5[%c0_i32_50, %c1_i32_51] : memref<2x8x!tpu.dma_semaphore, #tpu.memory_space<semaphore_mem>> -> memref<1x1x!tpu.dma_semaphore, #tpu.memory_space<semaphore_mem>>
      %73 = tpu.memref_squeeze %72 : memref<1x1x!tpu.dma_semaphore, #tpu.memory_space<semaphore_mem>> -> memref<!tpu.dma_semaphore, #tpu.memory_space<semaphore_mem>>
      tpu.enqueue_dma source(%69 : memref<128xf32, #tpu.memory_space<any>>) target(%71 : memref<128xf32, #tpu.memory_space<vmem>>) target_semaphore(%73 : memref<!tpu.dma_semaphore, #tpu.memory_space<semaphore_mem>>)
      %c2 = arith.constant 2 : index
      %74 = memref.load %arg1[%c2] : memref<16xi32, #tpu.memory_space<smem>>
      %c0_i32_54 = arith.constant 0 : i32
      %c2_i32_55 = arith.constant 2 : i32
      %c0_i32_56 = arith.constant 0 : i32
      %c2_i32_57 = arith.constant 2 : i32
      %c0_i32_58 = arith.constant 0 : i32
      %75 = tpu.memref_slice %arg2[%74, %c0_i32_58] : memref<16x128xf32, #tpu.memory_space<any>> -> memref<1x128xf32, #tpu.memory_space<any>>
      %76 = tpu.memref_squeeze %75 : memref<1x128xf32, #tpu.memory_space<any>> -> memref<128xf32, #tpu.memory_space<any>>
      %c0_i32_59 = arith.constant 0 : i32
      %77 = tpu.memref_slice %arg4[%c0_i32_54, %c2_i32_55, %c0_i32_59] : memref<2x8x128xf32, #tpu.memory_space<vmem>> -> memref<1x1x128xf32, #tpu.memory_space<vmem>>
      %78 = tpu.memref_squeeze %77 : memref<1x1x128xf32, #tpu.memory_space<vmem>> -> memref<128xf32, #tpu.memory_space<vmem>>
      %79 = tpu.memref_slice %arg5[%c0_i32_56, %c2_i32_57] : memref<2x8x!tpu.dma_semaphore, #tpu.memory_space<semaphore_mem>> -> memref<1x1x!tpu.dma_semaphore, #tpu.memory_space<semaphore_mem>>
      %80 = tpu.memref_squeeze %79 : memref<1x1x!tpu.dma_semaphore, #tpu.memory_space<semaphore_mem>> -> memref<!tpu.dma_semaphore, #tpu.memory_space<semaphore_mem>>
      tpu.enqueue_dma source(%76 : memref<128xf32, #tpu.memory_space<any>>) target(%78 : memref<128xf32, #tpu.memory_space<vmem>>) target_semaphore(%80 : memref<!tpu.dma_semaphore, #tpu.memory_space<semaphore_mem>>)
      %c3 = arith.constant 3 : index
      %81 = memref.load %arg1[%c3] : memref<16xi32, #tpu.memory_space<smem>>
      %c0_i32_60 = arith.constant 0 : i32
      %c3_i32_61 = arith.constant 3 : i32
      %c0_i32_62 = arith.constant 0 : i32
      %c3_i32_63 = arith.constant 3 : i32
      %c0_i32_64 = arith.constant 0 : i32
      %82 = tpu.memref_slice %arg2[%81, %c0_i32_64] : memref<16x128xf32, #tpu.memory_space<any>> -> memref<1x128xf32, #tpu.memory_space<any>>
      %83 = tpu.memref_squeeze %82 : memref<1x128xf32, #tpu.memory_space<any>> -> memref<128xf32, #tpu.memory_space<any>>
      %c0_i32_65 = arith.constant 0 : i32
      %84 = tpu.memref_slice %arg4[%c0_i32_60, %c3_i32_61, %c0_i32_65] : memref<2x8x128xf32, #tpu.memory_space<vmem>> -> memref<1x1x128xf32, #tpu.memory_space<vmem>>
      %85 = tpu.memref_squeeze %84 : memref<1x1x128xf32, #tpu.memory_space<vmem>> -> memref<128xf32, #tpu.memory_space<vmem>>
      %86 = tpu.memref_slice %arg5[%c0_i32_62, %c3_i32_63] : memref<2x8x!tpu.dma_semaphore, #tpu.memory_space<semaphore_mem>> -> memref<1x1x!tpu.dma_semaphore, #tpu.memory_space<semaphore_mem>>
      %87 = tpu.memref_squeeze %86 : memref<1x1x!tpu.dma_semaphore, #tpu.memory_space<semaphore_mem>> -> memref<!tpu.dma_semaphore, #tpu.memory_space<semaphore_mem>>
      tpu.enqueue_dma source(%83 : memref<128xf32, #tpu.memory_space<any>>) target(%85 : memref<128xf32, #tpu.memory_space<vmem>>) target_semaphore(%87 : memref<!tpu.dma_semaphore, #tpu.memory_space<semaphore_mem>>)
      %c4 = arith.constant 4 : index
      %88 = memref.load %arg1[%c4] : memref<16xi32, #tpu.memory_space<smem>>
      %c0_i32_66 = arith.constant 0 : i32
      %c4_i32_67 = arith.constant 4 : i32
      %c0_i32_68 = arith.constant 0 : i32
      %c4_i32_69 = arith.constant 4 : i32
      %c0_i32_70 = arith.constant 0 : i32
      %89 = tpu.memref_slice %arg2[%88, %c0_i32_70] : memref<16x128xf32, #tpu.memory_space<any>> -> memref<1x128xf32, #tpu.memory_space<any>>
      %90 = tpu.memref_squeeze %89 : memref<1x128xf32, #tpu.memory_space<any>> -> memref<128xf32, #tpu.memory_space<any>>
      %c0_i32_71 = arith.constant 0 : i32
      %91 = tpu.memref_slice %arg4[%c0_i32_66, %c4_i32_67, %c0_i32_71] : memref<2x8x128xf32, #tpu.memory_space<vmem>> -> memref<1x1x128xf32, #tpu.memory_space<vmem>>
      %92 = tpu.memref_squeeze %91 : memref<1x1x128xf32, #tpu.memory_space<vmem>> -> memref<128xf32, #tpu.memory_space<vmem>>
      %93 = tpu.memref_slice %arg5[%c0_i32_68, %c4_i32_69] : memref<2x8x!tpu.dma_semaphore, #tpu.memory_space<semaphore_mem>> -> memref<1x1x!tpu.dma_semaphore, #tpu.memory_space<semaphore_mem>>
      %94 = tpu.memref_squeeze %93 : memref<1x1x!tpu.dma_semaphore, #tpu.memory_space<semaphore_mem>> -> memref<!tpu.dma_semaphore, #tpu.memory_space<semaphore_mem>>
      tpu.enqueue_dma source(%90 : memref<128xf32, #tpu.memory_space<any>>) target(%92 : memref<128xf32, #tpu.memory_space<vmem>>) target_semaphore(%94 : memref<!tpu.dma_semaphore, #tpu.memory_space<semaphore_mem>>)
      %c5 = arith.constant 5 : index
      %95 = memref.load %arg1[%c5] : memref<16xi32, #tpu.memory_space<smem>>
      %c0_i32_72 = arith.constant 0 : i32
      %c5_i32_73 = arith.constant 5 : i32
      %c0_i32_74 = arith.constant 0 : i32
      %c5_i32_75 = arith.constant 5 : i32
      %c0_i32_76 = arith.constant 0 : i32
      %96 = tpu.memref_slice %arg2[%95, %c0_i32_76] : memref<16x128xf32, #tpu.memory_space<any>> -> memref<1x128xf32, #tpu.memory_space<any>>
      %97 = tpu.memref_squeeze %96 : memref<1x128xf32, #tpu.memory_space<any>> -> memref<128xf32, #tpu.memory_space<any>>
      %c0_i32_77 = arith.constant 0 : i32
      %98 = tpu.memref_slice %arg4[%c0_i32_72, %c5_i32_73, %c0_i32_77] : memref<2x8x128xf32, #tpu.memory_space<vmem>> -> memref<1x1x128xf32, #tpu.memory_space<vmem>>
      %99 = tpu.memref_squeeze %98 : memref<1x1x128xf32, #tpu.memory_space<vmem>> -> memref<128xf32, #tpu.memory_space<vmem>>
      %100 = tpu.memref_slice %arg5[%c0_i32_74, %c5_i32_75] : memref<2x8x!tpu.dma_semaphore, #tpu.memory_space<semaphore_mem>> -> memref<1x1x!tpu.dma_semaphore, #tpu.memory_space<semaphore_mem>>
      %101 = tpu.memref_squeeze %100 : memref<1x1x!tpu.dma_semaphore, #tpu.memory_space<semaphore_mem>> -> memref<!tpu.dma_semaphore, #tpu.memory_space<semaphore_mem>>
      tpu.enqueue_dma source(%97 : memref<128xf32, #tpu.memory_space<any>>) target(%99 : memref<128xf32, #tpu.memory_space<vmem>>) target_semaphore(%101 : memref<!tpu.dma_semaphore, #tpu.memory_space<semaphore_mem>>)
      %c6 = arith.constant 6 : index
      %102 = memref.load %arg1[%c6] : memref<16xi32, #tpu.memory_space<smem>>
      %c0_i32_78 = arith.constant 0 : i32
      %c6_i32_79 = arith.constant 6 : i32
      %c0_i32_80 = arith.constant 0 : i32
      %c6_i32_81 = arith.constant 6 : i32
      %c0_i32_82 = arith.constant 0 : i32
      %103 = tpu.memref_slice %arg2[%102, %c0_i32_82] : memref<16x128xf32, #tpu.memory_space<any>> -> memref<1x128xf32, #tpu.memory_space<any>>
      %104 = tpu.memref_squeeze %103 : memref<1x128xf32, #tpu.memory_space<any>> -> memref<128xf32, #tpu.memory_space<any>>
      %c0_i32_83 = arith.constant 0 : i32
      %105 = tpu.memref_slice %arg4[%c0_i32_78, %c6_i32_79, %c0_i32_83] : memref<2x8x128xf32, #tpu.memory_space<vmem>> -> memref<1x1x128xf32, #tpu.memory_space<vmem>>
      %106 = tpu.memref_squeeze %105 : memref<1x1x128xf32, #tpu.memory_space<vmem>> -> memref<128xf32, #tpu.memory_space<vmem>>
      %107 = tpu.memref_slice %arg5[%c0_i32_80, %c6_i32_81] : memref<2x8x!tpu.dma_semaphore, #tpu.memory_space<semaphore_mem>> -> memref<1x1x!tpu.dma_semaphore, #tpu.memory_space<semaphore_mem>>
      %108 = tpu.memref_squeeze %107 : memref<1x1x!tpu.dma_semaphore, #tpu.memory_space<semaphore_mem>> -> memref<!tpu.dma_semaphore, #tpu.memory_space<semaphore_mem>>
      tpu.enqueue_dma source(%104 : memref<128xf32, #tpu.memory_space<any>>) target(%106 : memref<128xf32, #tpu.memory_space<vmem>>) target_semaphore(%108 : memref<!tpu.dma_semaphore, #tpu.memory_space<semaphore_mem>>)
      %c7 = arith.constant 7 : index
      %109 = memref.load %arg1[%c7] : memref<16xi32, #tpu.memory_space<smem>>
      %c0_i32_84 = arith.constant 0 : i32
      %c7_i32_85 = arith.constant 7 : i32
      %c0_i32_86 = arith.constant 0 : i32
      %c7_i32_87 = arith.constant 7 : i32
      %c0_i32_88 = arith.constant 0 : i32
      %110 = tpu.memref_slice %arg2[%109, %c0_i32_88] : memref<16x128xf32, #tpu.memory_space<any>> -> memref<1x128xf32, #tpu.memory_space<any>>
      %111 = tpu.memref_squeeze %110 : memref<1x128xf32, #tpu.memory_space<any>> -> memref<128xf32, #tpu.memory_space<any>>
      %c0_i32_89 = arith.constant 0 : i32
      %112 = tpu.memref_slice %arg4[%c0_i32_84, %c7_i32_85, %c0_i32_89] : memref<2x8x128xf32, #tpu.memory_space<vmem>> -> memref<1x1x128xf32, #tpu.memory_space<vmem>>
      %113 = tpu.memref_squeeze %112 : memref<1x1x128xf32, #tpu.memory_space<vmem>> -> memref<128xf32, #tpu.memory_space<vmem>>
      %114 = tpu.memref_slice %arg5[%c0_i32_86, %c7_i32_87] : memref<2x8x!tpu.dma_semaphore, #tpu.memory_space<semaphore_mem>> -> memref<1x1x!tpu.dma_semaphore, #tpu.memory_space<semaphore_mem>>
      %115 = tpu.memref_squeeze %114 : memref<1x1x!tpu.dma_semaphore, #tpu.memory_space<semaphore_mem>> -> memref<!tpu.dma_semaphore, #tpu.memory_space<semaphore_mem>>
      tpu.enqueue_dma source(%111 : memref<128xf32, #tpu.memory_space<any>>) target(%113 : memref<128xf32, #tpu.memory_space<vmem>>) target_semaphore(%115 : memref<!tpu.dma_semaphore, #tpu.memory_space<semaphore_mem>>)
    } else {
    }
    %c1_i32 = arith.constant 1 : i32
    %4 = arith.addi %arg0, %c1_i32 : i32
    %c2_i32_1 = arith.constant 2 : i32
    %5 = arith.cmpi slt, %4, %c2_i32_1 : i32
    %6 = arith.extui %5 : i1 to i32
    %c0_i32_2 = arith.constant 0 : i32
    %7 = arith.cmpi ne, %6, %c0_i32_2 : i32
    scf.if %7 {
      %c1_i32_41 = arith.constant 1 : i32
      %60 = arith.addi %arg0, %c1_i32_41 : i32
      %c1_i32_42 = arith.constant 1 : i32
      %61 = arith.subi %c1_i32_42, %0 : i32
      %c8_i32 = arith.constant 8 : i32
      %62 = arith.muli %60, %c8_i32 : i32
      %c0_i32_43 = arith.constant 0 : i32
      %63 = arith.addi %62, %c0_i32_43 : i32
      %64 = arith.index_cast %63 : i32 to index
      %65 = memref.load %arg1[%64] : memref<16xi32, #tpu.memory_space<smem>>
      %c0_i32_44 = arith.constant 0 : i32
      %c0_i32_45 = arith.constant 0 : i32
      %c0_i32_46 = arith.constant 0 : i32
      %66 = tpu.memref_slice %arg2[%65, %c0_i32_46] : memref<16x128xf32, #tpu.memory_space<any>> -> memref<1x128xf32, #tpu.memory_space<any>>
      %67 = tpu.memref_squeeze %66 : memref<1x128xf32, #tpu.memory_space<any>> -> memref<128xf32, #tpu.memory_space<any>>
      %c0_i32_47 = arith.constant 0 : i32
      %68 = tpu.memref_slice %arg4[%61, %c0_i32_44, %c0_i32_47] : memref<2x8x128xf32, #tpu.memory_space<vmem>> -> memref<1x1x128xf32, #tpu.memory_space<vmem>>
      %69 = tpu.memref_squeeze %68 : memref<1x1x128xf32, #tpu.memory_space<vmem>> -> memref<128xf32, #tpu.memory_space<vmem>>
      %70 = tpu.memref_slice %arg5[%61, %c0_i32_45] : memref<2x8x!tpu.dma_semaphore, #tpu.memory_space<semaphore_mem>> -> memref<1x1x!tpu.dma_semaphore, #tpu.memory_space<semaphore_mem>>
      %71 = tpu.memref_squeeze %70 : memref<1x1x!tpu.dma_semaphore, #tpu.memory_space<semaphore_mem>> -> memref<!tpu.dma_semaphore, #tpu.memory_space<semaphore_mem>>
      tpu.enqueue_dma source(%67 : memref<128xf32, #tpu.memory_space<any>>) target(%69 : memref<128xf32, #tpu.memory_space<vmem>>) target_semaphore(%71 : memref<!tpu.dma_semaphore, #tpu.memory_space<semaphore_mem>>)
      %c8_i32_48 = arith.constant 8 : i32
      %72 = arith.muli %60, %c8_i32_48 : i32
      %c1_i32_49 = arith.constant 1 : i32
      %73 = arith.addi %72, %c1_i32_49 : i32
      %74 = arith.index_cast %73 : i32 to index
      %75 = memref.load %arg1[%74] : memref<16xi32, #tpu.memory_space<smem>>
      %c1_i32_50 = arith.constant 1 : i32
      %c1_i32_51 = arith.constant 1 : i32
      %c0_i32_52 = arith.constant 0 : i32
      %76 = tpu.memref_slice %arg2[%75, %c0_i32_52] : memref<16x128xf32, #tpu.memory_space<any>> -> memref<1x128xf32, #tpu.memory_space<any>>
      %77 = tpu.memref_squeeze %76 : memref<1x128xf32, #tpu.memory_space<any>> -> memref<128xf32, #tpu.memory_space<any>>
      %c0_i32_53 = arith.constant 0 : i32
      %78 = tpu.memref_slice %arg4[%61, %c1_i32_50, %c0_i32_53] : memref<2x8x128xf32, #tpu.memory_space<vmem>> -> memref<1x1x128xf32, #tpu.memory_space<vmem>>
      %79 = tpu.memref_squeeze %78 : memref<1x1x128xf32, #tpu.memory_space<vmem>> -> memref<128xf32, #tpu.memory_space<vmem>>
      %80 = tpu.memref_slice %arg5[%61, %c1_i32_51] : memref<2x8x!tpu.dma_semaphore, #tpu.memory_space<semaphore_mem>> -> memref<1x1x!tpu.dma_semaphore, #tpu.memory_space<semaphore_mem>>
      %81 = tpu.memref_squeeze %80 : memref<1x1x!tpu.dma_semaphore, #tpu.memory_space<semaphore_mem>> -> memref<!tpu.dma_semaphore, #tpu.memory_space<semaphore_mem>>
      tpu.enqueue_dma source(%77 : memref<128xf32, #tpu.memory_space<any>>) target(%79 : memref<128xf32, #tpu.memory_space<vmem>>) target_semaphore(%81 : memref<!tpu.dma_semaphore, #tpu.memory_space<semaphore_mem>>)
      %c8_i32_54 = arith.constant 8 : i32
      %82 = arith.muli %60, %c8_i32_54 : i32
      %c2_i32_55 = arith.constant 2 : i32
      %83 = arith.addi %82, %c2_i32_55 : i32
      %84 = arith.index_cast %83 : i32 to index
      %85 = memref.load %arg1[%84] : memref<16xi32, #tpu.memory_space<smem>>
      %c2_i32_56 = arith.constant 2 : i32
      %c2_i32_57 = arith.constant 2 : i32
      %c0_i32_58 = arith.constant 0 : i32
      %86 = tpu.memref_slice %arg2[%85, %c0_i32_58] : memref<16x128xf32, #tpu.memory_space<any>> -> memref<1x128xf32, #tpu.memory_space<any>>
      %87 = tpu.memref_squeeze %86 : memref<1x128xf32, #tpu.memory_space<any>> -> memref<128xf32, #tpu.memory_space<any>>
      %c0_i32_59 = arith.constant 0 : i32
      %88 = tpu.memref_slice %arg4[%61, %c2_i32_56, %c0_i32_59] : memref<2x8x128xf32, #tpu.memory_space<vmem>> -> memref<1x1x128xf32, #tpu.memory_space<vmem>>
      %89 = tpu.memref_squeeze %88 : memref<1x1x128xf32, #tpu.memory_space<vmem>> -> memref<128xf32, #tpu.memory_space<vmem>>
      %90 = tpu.memref_slice %arg5[%61, %c2_i32_57] : memref<2x8x!tpu.dma_semaphore, #tpu.memory_space<semaphore_mem>> -> memref<1x1x!tpu.dma_semaphore, #tpu.memory_space<semaphore_mem>>
      %91 = tpu.memref_squeeze %90 : memref<1x1x!tpu.dma_semaphore, #tpu.memory_space<semaphore_mem>> -> memref<!tpu.dma_semaphore, #tpu.memory_space<semaphore_mem>>
      tpu.enqueue_dma source(%87 : memref<128xf32, #tpu.memory_space<any>>) target(%89 : memref<128xf32, #tpu.memory_space<vmem>>) target_semaphore(%91 : memref<!tpu.dma_semaphore, #tpu.memory_space<semaphore_mem>>)
      %c8_i32_60 = arith.constant 8 : i32
      %92 = arith.muli %60, %c8_i32_60 : i32
      %c3_i32_61 = arith.constant 3 : i32
      %93 = arith.addi %92, %c3_i32_61 : i32
      %94 = arith.index_cast %93 : i32 to index
      %95 = memref.load %arg1[%94] : memref<16xi32, #tpu.memory_space<smem>>
      %c3_i32_62 = arith.constant 3 : i32
      %c3_i32_63 = arith.constant 3 : i32
      %c0_i32_64 = arith.constant 0 : i32
      %96 = tpu.memref_slice %arg2[%95, %c0_i32_64] : memref<16x128xf32, #tpu.memory_space<any>> -> memref<1x128xf32, #tpu.memory_space<any>>
      %97 = tpu.memref_squeeze %96 : memref<1x128xf32, #tpu.memory_space<any>> -> memref<128xf32, #tpu.memory_space<any>>
      %c0_i32_65 = arith.constant 0 : i32
      %98 = tpu.memref_slice %arg4[%61, %c3_i32_62, %c0_i32_65] : memref<2x8x128xf32, #tpu.memory_space<vmem>> -> memref<1x1x128xf32, #tpu.memory_space<vmem>>
      %99 = tpu.memref_squeeze %98 : memref<1x1x128xf32, #tpu.memory_space<vmem>> -> memref<128xf32, #tpu.memory_space<vmem>>
      %100 = tpu.memref_slice %arg5[%61, %c3_i32_63] : memref<2x8x!tpu.dma_semaphore, #tpu.memory_space<semaphore_mem>> -> memref<1x1x!tpu.dma_semaphore, #tpu.memory_space<semaphore_mem>>
      %101 = tpu.memref_squeeze %100 : memref<1x1x!tpu.dma_semaphore, #tpu.memory_space<semaphore_mem>> -> memref<!tpu.dma_semaphore, #tpu.memory_space<semaphore_mem>>
      tpu.enqueue_dma source(%97 : memref<128xf32, #tpu.memory_space<any>>) target(%99 : memref<128xf32, #tpu.memory_space<vmem>>) target_semaphore(%101 : memref<!tpu.dma_semaphore, #tpu.memory_space<semaphore_mem>>)
      %c8_i32_66 = arith.constant 8 : i32
      %102 = arith.muli %60, %c8_i32_66 : i32
      %c4_i32_67 = arith.constant 4 : i32
      %103 = arith.addi %102, %c4_i32_67 : i32
      %104 = arith.index_cast %103 : i32 to index
      %105 = memref.load %arg1[%104] : memref<16xi32, #tpu.memory_space<smem>>
      %c4_i32_68 = arith.constant 4 : i32
      %c4_i32_69 = arith.constant 4 : i32
      %c0_i32_70 = arith.constant 0 : i32
      %106 = tpu.memref_slice %arg2[%105, %c0_i32_70] : memref<16x128xf32, #tpu.memory_space<any>> -> memref<1x128xf32, #tpu.memory_space<any>>
      %107 = tpu.memref_squeeze %106 : memref<1x128xf32, #tpu.memory_space<any>> -> memref<128xf32, #tpu.memory_space<any>>
      %c0_i32_71 = arith.constant 0 : i32
      %108 = tpu.memref_slice %arg4[%61, %c4_i32_68, %c0_i32_71] : memref<2x8x128xf32, #tpu.memory_space<vmem>> -> memref<1x1x128xf32, #tpu.memory_space<vmem>>
      %109 = tpu.memref_squeeze %108 : memref<1x1x128xf32, #tpu.memory_space<vmem>> -> memref<128xf32, #tpu.memory_space<vmem>>
      %110 = tpu.memref_slice %arg5[%61, %c4_i32_69] : memref<2x8x!tpu.dma_semaphore, #tpu.memory_space<semaphore_mem>> -> memref<1x1x!tpu.dma_semaphore, #tpu.memory_space<semaphore_mem>>
      %111 = tpu.memref_squeeze %110 : memref<1x1x!tpu.dma_semaphore, #tpu.memory_space<semaphore_mem>> -> memref<!tpu.dma_semaphore, #tpu.memory_space<semaphore_mem>>
      tpu.enqueue_dma source(%107 : memref<128xf32, #tpu.memory_space<any>>) target(%109 : memref<128xf32, #tpu.memory_space<vmem>>) target_semaphore(%111 : memref<!tpu.dma_semaphore, #tpu.memory_space<semaphore_mem>>)
      %c8_i32_72 = arith.constant 8 : i32
      %112 = arith.muli %60, %c8_i32_72 : i32
      %c5_i32_73 = arith.constant 5 : i32
      %113 = arith.addi %112, %c5_i32_73 : i32
      %114 = arith.index_cast %113 : i32 to index
      %115 = memref.load %arg1[%114] : memref<16xi32, #tpu.memory_space<smem>>
      %c5_i32_74 = arith.constant 5 : i32
      %c5_i32_75 = arith.constant 5 : i32
      %c0_i32_76 = arith.constant 0 : i32
      %116 = tpu.memref_slice %arg2[%115, %c0_i32_76] : memref<16x128xf32, #tpu.memory_space<any>> -> memref<1x128xf32, #tpu.memory_space<any>>
      %117 = tpu.memref_squeeze %116 : memref<1x128xf32, #tpu.memory_space<any>> -> memref<128xf32, #tpu.memory_space<any>>
      %c0_i32_77 = arith.constant 0 : i32
      %118 = tpu.memref_slice %arg4[%61, %c5_i32_74, %c0_i32_77] : memref<2x8x128xf32, #tpu.memory_space<vmem>> -> memref<1x1x128xf32, #tpu.memory_space<vmem>>
      %119 = tpu.memref_squeeze %118 : memref<1x1x128xf32, #tpu.memory_space<vmem>> -> memref<128xf32, #tpu.memory_space<vmem>>
      %120 = tpu.memref_slice %arg5[%61, %c5_i32_75] : memref<2x8x!tpu.dma_semaphore, #tpu.memory_space<semaphore_mem>> -> memref<1x1x!tpu.dma_semaphore, #tpu.memory_space<semaphore_mem>>
      %121 = tpu.memref_squeeze %120 : memref<1x1x!tpu.dma_semaphore, #tpu.memory_space<semaphore_mem>> -> memref<!tpu.dma_semaphore, #tpu.memory_space<semaphore_mem>>
      tpu.enqueue_dma source(%117 : memref<128xf32, #tpu.memory_space<any>>) target(%119 : memref<128xf32, #tpu.memory_space<vmem>>) target_semaphore(%121 : memref<!tpu.dma_semaphore, #tpu.memory_space<semaphore_mem>>)
      %c8_i32_78 = arith.constant 8 : i32
      %122 = arith.muli %60, %c8_i32_78 : i32
      %c6_i32_79 = arith.constant 6 : i32
      %123 = arith.addi %122, %c6_i32_79 : i32
      %124 = arith.index_cast %123 : i32 to index
      %125 = memref.load %arg1[%124] : memref<16xi32, #tpu.memory_space<smem>>
      %c6_i32_80 = arith.constant 6 : i32
      %c6_i32_81 = arith.constant 6 : i32
      %c0_i32_82 = arith.constant 0 : i32
      %126 = tpu.memref_slice %arg2[%125, %c0_i32_82] : memref<16x128xf32, #tpu.memory_space<any>> -> memref<1x128xf32, #tpu.memory_space<any>>
      %127 = tpu.memref_squeeze %126 : memref<1x128xf32, #tpu.memory_space<any>> -> memref<128xf32, #tpu.memory_space<any>>
      %c0_i32_83 = arith.constant 0 : i32
      %128 = tpu.memref_slice %arg4[%61, %c6_i32_80, %c0_i32_83] : memref<2x8x128xf32, #tpu.memory_space<vmem>> -> memref<1x1x128xf32, #tpu.memory_space<vmem>>
      %129 = tpu.memref_squeeze %128 : memref<1x1x128xf32, #tpu.memory_space<vmem>> -> memref<128xf32, #tpu.memory_space<vmem>>
      %130 = tpu.memref_slice %arg5[%61, %c6_i32_81] : memref<2x8x!tpu.dma_semaphore, #tpu.memory_space<semaphore_mem>> -> memref<1x1x!tpu.dma_semaphore, #tpu.memory_space<semaphore_mem>>
      %131 = tpu.memref_squeeze %130 : memref<1x1x!tpu.dma_semaphore, #tpu.memory_space<semaphore_mem>> -> memref<!tpu.dma_semaphore, #tpu.memory_space<semaphore_mem>>
      tpu.enqueue_dma source(%127 : memref<128xf32, #tpu.memory_space<any>>) target(%129 : memref<128xf32, #tpu.memory_space<vmem>>) target_semaphore(%131 : memref<!tpu.dma_semaphore, #tpu.memory_space<semaphore_mem>>)
      %c8_i32_84 = arith.constant 8 : i32
      %132 = arith.muli %60, %c8_i32_84 : i32
      %c7_i32_85 = arith.constant 7 : i32
      %133 = arith.addi %132, %c7_i32_85 : i32
      %134 = arith.index_cast %133 : i32 to index
      %135 = memref.load %arg1[%134] : memref<16xi32, #tpu.memory_space<smem>>
      %c7_i32_86 = arith.constant 7 : i32
      %c7_i32_87 = arith.constant 7 : i32
      %c0_i32_88 = arith.constant 0 : i32
      %136 = tpu.memref_slice %arg2[%135, %c0_i32_88] : memref<16x128xf32, #tpu.memory_space<any>> -> memref<1x128xf32, #tpu.memory_space<any>>
      %137 = tpu.memref_squeeze %136 : memref<1x128xf32, #tpu.memory_space<any>> -> memref<128xf32, #tpu.memory_space<any>>
      %c0_i32_89 = arith.constant 0 : i32
      %138 = tpu.memref_slice %arg4[%61, %c7_i32_86, %c0_i32_89] : memref<2x8x128xf32, #tpu.memory_space<vmem>> -> memref<1x1x128xf32, #tpu.memory_space<vmem>>
      %139 = tpu.memref_squeeze %138 : memref<1x1x128xf32, #tpu.memory_space<vmem>> -> memref<128xf32, #tpu.memory_space<vmem>>
      %140 = tpu.memref_slice %arg5[%61, %c7_i32_87] : memref<2x8x!tpu.dma_semaphore, #tpu.memory_space<semaphore_mem>> -> memref<1x1x!tpu.dma_semaphore, #tpu.memory_space<semaphore_mem>>
      %141 = tpu.memref_squeeze %140 : memref<1x1x!tpu.dma_semaphore, #tpu.memory_space<semaphore_mem>> -> memref<!tpu.dma_semaphore, #tpu.memory_space<semaphore_mem>>
      tpu.enqueue_dma source(%137 : memref<128xf32, #tpu.memory_space<any>>) target(%139 : memref<128xf32, #tpu.memory_space<vmem>>) target_semaphore(%141 : memref<!tpu.dma_semaphore, #tpu.memory_space<semaphore_mem>>)
    } else {
    }
    %c0_i32_3 = arith.constant 0 : i32
    %c0_i32_4 = arith.constant 0 : i32
    %c0_i32_5 = arith.constant 0 : i32
    %c0_i32_6 = arith.constant 0 : i32
    %8 = tpu.memref_slice %arg2[%c0_i32_3, %c0_i32_6] : memref<16x128xf32, #tpu.memory_space<any>> -> memref<1x128xf32, #tpu.memory_space<any>>
    %9 = tpu.memref_squeeze %8 : memref<1x128xf32, #tpu.memory_space<any>> -> memref<128xf32, #tpu.memory_space<any>>
    %c0_i32_7 = arith.constant 0 : i32
    %10 = tpu.memref_slice %arg4[%0, %c0_i32_4, %c0_i32_7] : memref<2x8x128xf32, #tpu.memory_space<vmem>> -> memref<1x1x128xf32, #tpu.memory_space<vmem>>
    %11 = tpu.memref_squeeze %10 : memref<1x1x128xf32, #tpu.memory_space<vmem>> -> memref<128xf32, #tpu.memory_space<vmem>>
    %12 = tpu.memref_slice %arg5[%0, %c0_i32_5] : memref<2x8x!tpu.dma_semaphore, #tpu.memory_space<semaphore_mem>> -> memref<1x1x!tpu.dma_semaphore, #tpu.memory_space<semaphore_mem>>
    %13 = tpu.memref_squeeze %12 : memref<1x1x!tpu.dma_semaphore, #tpu.memory_space<semaphore_mem>> -> memref<!tpu.dma_semaphore, #tpu.memory_space<semaphore_mem>>
    tpu.wait_dma2 semaphore(%13 : memref<!tpu.dma_semaphore, #tpu.memory_space<semaphore_mem>>) src(%9 : memref<128xf32, #tpu.memory_space<any>>) dst(%11 : memref<128xf32, #tpu.memory_space<vmem>>)
    %c0_i32_8 = arith.constant 0 : i32
    %c1_i32_9 = arith.constant 1 : i32
    %c1_i32_10 = arith.constant 1 : i32
    %c0_i32_11 = arith.constant 0 : i32
    %14 = tpu.memref_slice %arg2[%c0_i32_8, %c0_i32_11] : memref<16x128xf32, #tpu.memory_space<any>> -> memref<1x128xf32, #tpu.memory_space<any>>
    %15 = tpu.memref_squeeze %14 : memref<1x128xf32, #tpu.memory_space<any>> -> memref<128xf32, #tpu.memory_space<any>>
    %c0_i32_12 = arith.constant 0 : i32
    %16 = tpu.memref_slice %arg4[%0, %c1_i32_9, %c0_i32_12] : memref<2x8x128xf32, #tpu.memory_space<vmem>> -> memref<1x1x128xf32, #tpu.memory_space<vmem>>
    %17 = tpu.memref_squeeze %16 : memref<1x1x128xf32, #tpu.memory_space<vmem>> -> memref<128xf32, #tpu.memory_space<vmem>>
    %18 = tpu.memref_slice %arg5[%0, %c1_i32_10] : memref<2x8x!tpu.dma_semaphore, #tpu.memory_space<semaphore_mem>> -> memref<1x1x!tpu.dma_semaphore, #tpu.memory_space<semaphore_mem>>
    %19 = tpu.memref_squeeze %18 : memref<1x1x!tpu.dma_semaphore, #tpu.memory_space<semaphore_mem>> -> memref<!tpu.dma_semaphore, #tpu.memory_space<semaphore_mem>>
    tpu.wait_dma2 semaphore(%19 : memref<!tpu.dma_semaphore, #tpu.memory_space<semaphore_mem>>) src(%15 : memref<128xf32, #tpu.memory_space<any>>) dst(%17 : memref<128xf32, #tpu.memory_space<vmem>>)
    %c0_i32_13 = arith.constant 0 : i32
    %c2_i32_14 = arith.constant 2 : i32
    %c2_i32_15 = arith.constant 2 : i32
    %c0_i32_16 = arith.constant 0 : i32
    %20 = tpu.memref_slice %arg2[%c0_i32_13, %c0_i32_16] : memref<16x128xf32, #tpu.memory_space<any>> -> memref<1x128xf32, #tpu.memory_space<any>>
    %21 = tpu.memref_squeeze %20 : memref<1x128xf32, #tpu.memory_space<any>> -> memref<128xf32, #tpu.memory_space<any>>
    %c0_i32_17 = arith.constant 0 : i32
    %22 = tpu.memref_slice %arg4[%0, %c2_i32_14, %c0_i32_17] : memref<2x8x128xf32, #tpu.memory_space<vmem>> -> memref<1x1x128xf32, #tpu.memory_space<vmem>>
    %23 = tpu.memref_squeeze %22 : memref<1x1x128xf32, #tpu.memory_space<vmem>> -> memref<128xf32, #tpu.memory_space<vmem>>
    %24 = tpu.memref_slice %arg5[%0, %c2_i32_15] : memref<2x8x!tpu.dma_semaphore, #tpu.memory_space<semaphore_mem>> -> memref<1x1x!tpu.dma_semaphore, #tpu.memory_space<semaphore_mem>>
    %25 = tpu.memref_squeeze %24 : memref<1x1x!tpu.dma_semaphore, #tpu.memory_space<semaphore_mem>> -> memref<!tpu.dma_semaphore, #tpu.memory_space<semaphore_mem>>
    tpu.wait_dma2 semaphore(%25 : memref<!tpu.dma_semaphore, #tpu.memory_space<semaphore_mem>>) src(%21 : memref<128xf32, #tpu.memory_space<any>>) dst(%23 : memref<128xf32, #tpu.memory_space<vmem>>)
    %c0_i32_18 = arith.constant 0 : i32
    %c3_i32 = arith.constant 3 : i32
    %c3_i32_19 = arith.constant 3 : i32
    %c0_i32_20 = arith.constant 0 : i32
    %26 = tpu.memref_slice %arg2[%c0_i32_18, %c0_i32_20] : memref<16x128xf32, #tpu.memory_space<any>> -> memref<1x128xf32, #tpu.memory_space<any>>
    %27 = tpu.memref_squeeze %26 : memref<1x128xf32, #tpu.memory_space<any>> -> memref<128xf32, #tpu.memory_space<any>>
    %c0_i32_21 = arith.constant 0 : i32
    %28 = tpu.memref_slice %arg4[%0, %c3_i32, %c0_i32_21] : memref<2x8x128xf32, #tpu.memory_space<vmem>> -> memref<1x1x128xf32, #tpu.memory_space<vmem>>
    %29 = tpu.memref_squeeze %28 : memref<1x1x128xf32, #tpu.memory_space<vmem>> -> memref<128xf32, #tpu.memory_space<vmem>>
    %30 = tpu.memref_slice %arg5[%0, %c3_i32_19] : memref<2x8x!tpu.dma_semaphore, #tpu.memory_space<semaphore_mem>> -> memref<1x1x!tpu.dma_semaphore, #tpu.memory_space<semaphore_mem>>
    %31 = tpu.memref_squeeze %30 : memref<1x1x!tpu.dma_semaphore, #tpu.memory_space<semaphore_mem>> -> memref<!tpu.dma_semaphore, #tpu.memory_space<semaphore_mem>>
    tpu.wait_dma2 semaphore(%31 : memref<!tpu.dma_semaphore, #tpu.memory_space<semaphore_mem>>) src(%27 : memref<128xf32, #tpu.memory_space<any>>) dst(%29 : memref<128xf32, #tpu.memory_space<vmem>>)
    %c0_i32_22 = arith.constant 0 : i32
    %c4_i32 = arith.constant 4 : i32
    %c4_i32_23 = arith.constant 4 : i32
    %c0_i32_24 = arith.constant 0 : i32
    %32 = tpu.memref_slice %arg2[%c0_i32_22, %c0_i32_24] : memref<16x128xf32, #tpu.memory_space<any>> -> memref<1x128xf32, #tpu.memory_space<any>>
    %33 = tpu.memref_squeeze %32 : memref<1x128xf32, #tpu.memory_space<any>> -> memref<128xf32, #tpu.memory_space<any>>
    %c0_i32_25 = arith.constant 0 : i32
    %34 = tpu.memref_slice %arg4[%0, %c4_i32, %c0_i32_25] : memref<2x8x128xf32, #tpu.memory_space<vmem>> -> memref<1x1x128xf32, #tpu.memory_space<vmem>>
    %35 = tpu.memref_squeeze %34 : memref<1x1x128xf32, #tpu.memory_space<vmem>> -> memref<128xf32, #tpu.memory_space<vmem>>
    %36 = tpu.memref_slice %arg5[%0, %c4_i32_23] : memref<2x8x!tpu.dma_semaphore, #tpu.memory_space<semaphore_mem>> -> memref<1x1x!tpu.dma_semaphore, #tpu.memory_space<semaphore_mem>>
    %37 = tpu.memref_squeeze %36 : memref<1x1x!tpu.dma_semaphore, #tpu.memory_space<semaphore_mem>> -> memref<!tpu.dma_semaphore, #tpu.memory_space<semaphore_mem>>
    tpu.wait_dma2 semaphore(%37 : memref<!tpu.dma_semaphore, #tpu.memory_space<semaphore_mem>>) src(%33 : memref<128xf32, #tpu.memory_space<any>>) dst(%35 : memref<128xf32, #tpu.memory_space<vmem>>)
    %c0_i32_26 = arith.constant 0 : i32
    %c5_i32 = arith.constant 5 : i32
    %c5_i32_27 = arith.constant 5 : i32
    %c0_i32_28 = arith.constant 0 : i32
    %38 = tpu.memref_slice %arg2[%c0_i32_26, %c0_i32_28] : memref<16x128xf32, #tpu.memory_space<any>> -> memref<1x128xf32, #tpu.memory_space<any>>
    %39 = tpu.memref_squeeze %38 : memref<1x128xf32, #tpu.memory_space<any>> -> memref<128xf32, #tpu.memory_space<any>>
    %c0_i32_29 = arith.constant 0 : i32
    %40 = tpu.memref_slice %arg4[%0, %c5_i32, %c0_i32_29] : memref<2x8x128xf32, #tpu.memory_space<vmem>> -> memref<1x1x128xf32, #tpu.memory_space<vmem>>
    %41 = tpu.memref_squeeze %40 : memref<1x1x128xf32, #tpu.memory_space<vmem>> -> memref<128xf32, #tpu.memory_space<vmem>>
    %42 = tpu.memref_slice %arg5[%0, %c5_i32_27] : memref<2x8x!tpu.dma_semaphore, #tpu.memory_space<semaphore_mem>> -> memref<1x1x!tpu.dma_semaphore, #tpu.memory_space<semaphore_mem>>
    %43 = tpu.memref_squeeze %42 : memref<1x1x!tpu.dma_semaphore, #tpu.memory_space<semaphore_mem>> -> memref<!tpu.dma_semaphore, #tpu.memory_space<semaphore_mem>>
    tpu.wait_dma2 semaphore(%43 : memref<!tpu.dma_semaphore, #tpu.memory_space<semaphore_mem>>) src(%39 : memref<128xf32, #tpu.memory_space<any>>) dst(%41 : memref<128xf32, #tpu.memory_space<vmem>>)
    %c0_i32_30 = arith.constant 0 : i32
    %c6_i32 = arith.constant 6 : i32
    %c6_i32_31 = arith.constant 6 : i32
    %c0_i32_32 = arith.constant 0 : i32
    %44 = tpu.memref_slice %arg2[%c0_i32_30, %c0_i32_32] : memref<16x128xf32, #tpu.memory_space<any>> -> memref<1x128xf32, #tpu.memory_space<any>>
    %45 = tpu.memref_squeeze %44 : memref<1x128xf32, #tpu.memory_space<any>> -> memref<128xf32, #tpu.memory_space<any>>
    %c0_i32_33 = arith.constant 0 : i32
    %46 = tpu.memref_slice %arg4[%0, %c6_i32, %c0_i32_33] : memref<2x8x128xf32, #tpu.memory_space<vmem>> -> memref<1x1x128xf32, #tpu.memory_space<vmem>>
    %47 = tpu.memref_squeeze %46 : memref<1x1x128xf32, #tpu.memory_space<vmem>> -> memref<128xf32, #tpu.memory_space<vmem>>
    %48 = tpu.memref_slice %arg5[%0, %c6_i32_31] : memref<2x8x!tpu.dma_semaphore, #tpu.memory_space<semaphore_mem>> -> memref<1x1x!tpu.dma_semaphore, #tpu.memory_space<semaphore_mem>>
    %49 = tpu.memref_squeeze %48 : memref<1x1x!tpu.dma_semaphore, #tpu.memory_space<semaphore_mem>> -> memref<!tpu.dma_semaphore, #tpu.memory_space<semaphore_mem>>
    tpu.wait_dma2 semaphore(%49 : memref<!tpu.dma_semaphore, #tpu.memory_space<semaphore_mem>>) src(%45 : memref<128xf32, #tpu.memory_space<any>>) dst(%47 : memref<128xf32, #tpu.memory_space<vmem>>)
    %c0_i32_34 = arith.constant 0 : i32
    %c7_i32 = arith.constant 7 : i32
    %c7_i32_35 = arith.constant 7 : i32
    %c0_i32_36 = arith.constant 0 : i32
    %50 = tpu.memref_slice %arg2[%c0_i32_34, %c0_i32_36] : memref<16x128xf32, #tpu.memory_space<any>> -> memref<1x128xf32, #tpu.memory_space<any>>
    %51 = tpu.memref_squeeze %50 : memref<1x128xf32, #tpu.memory_space<any>> -> memref<128xf32, #tpu.memory_space<any>>
    %c0_i32_37 = arith.constant 0 : i32
    %52 = tpu.memref_slice %arg4[%0, %c7_i32, %c0_i32_37] : memref<2x8x128xf32, #tpu.memory_space<vmem>> -> memref<1x1x128xf32, #tpu.memory_space<vmem>>
    %53 = tpu.memref_squeeze %52 : memref<1x1x128xf32, #tpu.memory_space<vmem>> -> memref<128xf32, #tpu.memory_space<vmem>>
    %54 = tpu.memref_slice %arg5[%0, %c7_i32_35] : memref<2x8x!tpu.dma_semaphore, #tpu.memory_space<semaphore_mem>> -> memref<1x1x!tpu.dma_semaphore, #tpu.memory_space<semaphore_mem>>
    %55 = tpu.memref_squeeze %54 : memref<1x1x!tpu.dma_semaphore, #tpu.memory_space<semaphore_mem>> -> memref<!tpu.dma_semaphore, #tpu.memory_space<semaphore_mem>>
    tpu.wait_dma2 semaphore(%55 : memref<!tpu.dma_semaphore, #tpu.memory_space<semaphore_mem>>) src(%51 : memref<128xf32, #tpu.memory_space<any>>) dst(%53 : memref<128xf32, #tpu.memory_space<vmem>>)
    %56 = arith.index_cast %0 : i32 to index
    %c0 = arith.constant 0 : index
    %c0_38 = arith.constant 0 : index
    %57 = vector.load %arg4[%56, %c0, %c0_38] : memref<2x8x128xf32, #tpu.memory_space<vmem>>, vector<1x8x128xf32>
    %58 = vector.shape_cast %57 : vector<1x8x128xf32> to vector<8x128xf32>
    %c0_39 = arith.constant 0 : index
    %c0_40 = arith.constant 0 : index
    %59 = vector.load %arg3[%c0_39, %c0_40] : memref<8x128xf32, #tpu.memory_space<vmem>>, vector<8x128xf32>
    tpu.vector_store %arg3[%c0_39, %c0_40], %58 {strides = array<i32>} : memref<8x128xf32, #tpu.memory_space<vmem>>, vector<8x128xf32>,
    return
  }
  func.func @transform_1(%arg0: i32, %arg1: memref<16xi32, #tpu.memory_space<smem>>) -> (i32, i32) {
    %c0_i32 = arith.constant 0 : i32
    %c0_i32_0 = arith.constant 0 : i32
    return %arg0, %c0_i32 : i32, i32
  }
}

</mosaic_0001>

<llo_original>
// kernel: tpu_custom_call.1
$region0: #{tpu_custom_call.1}
  #allocation0 [shape = 'u32[]', space=smem, size = 0x4, offset = 0x4, fixed_abs, tag = 'smem constant byte address 0x4 - core index']
  #allocation1 [shape = 'u32[72,128]{1,0:T(1,128)}', space=vmem, size = 0x9000, scoped, tag = 'internal scratch']
  #allocation2 [shape = 'f32[2,8,128]{2,1,0:T(8,128)}', space=vmem, size = 0x2000, scoped, tag = 'scratch operand']
  #allocation3 [shape = 's32[16]{0}', space=sflag, size = 0x40, scoped, tag = 'scratch operand']
  #allocation4 [shape = 's32[1]{0}', space=sflag, size = 0x4, scoped, tag = 'scoped memory for tpu_custom_call.1']
  #allocation5 [shape = 'u8[512]{0}', space=smem, size = 0x200, scoped, tag = 'prefetched SMEM operand 0']
  #allocation8 [shape = 's32[]', space=sflag, size = 0x4, offset = 0, fixed_abs, tag = 'sflag constant byte address 0x0 - dummy sync flag']
  #allocation9 [shape = 's32[]', space=sflag, size = 0x4, offset = 0, fixed_abs, tag = 'sflag constant byte address 0x0 - dummy sync flag']
  #allocation10 [shape = 'u32[]', space=smem, size = 0x4, offset = 0x44, fixed_abs, tag = 'smem constant byte address 0x44 - assertion arg 0']
  #allocation11 [shape = 'u32[]', space=smem, size = 0x4, offset = 0x48, fixed_abs, tag = 'smem constant byte address 0x48 - assertion arg 1']
  #allocation12 [shape = 's32[]', space=sflag, size = 0x4, offset = 0, fixed_abs, tag = 'sflag constant byte address 0x0 - dummy sync flag']
  #allocation13 [shape = 's32[]', space=sflag, size = 0x4, offset = 0, fixed_abs, tag = 'sflag constant byte address 0x0 - dummy sync flag']
  #allocation14 [shape = 's32[]', space=sflag, size = 0x4, offset = 0, fixed_abs, tag = 'sflag constant byte address 0x0 - dummy sync flag']
  #allocation15 [shape = 's32[]', space=sflag, size = 0x4, offset = 0, fixed_abs, tag = 'sflag constant byte address 0x0 - dummy sync flag']
  #allocation16 [shape = 's32[]', space=sflag, size = 0x4, offset = 0, fixed_abs, tag = 'sflag constant byte address 0x0 - dummy sync flag']
  #allocation17 [shape = 's32[]', space=sflag, size = 0x4, offset = 0, fixed_abs, tag = 'sflag constant byte address 0x0 - dummy sync flag']
  #allocation18 [shape = 's32[]', space=sflag, size = 0x4, offset = 0, fixed_abs, tag = 'sflag constant byte address 0x0 - dummy sync flag']
  #allocation19 [shape = 's32[]', space=sflag, size = 0x4, offset = 0, fixed_abs, tag = 'sflag constant byte address 0x0 - dummy sync flag']
  #allocation20 [shape = 's32[]', space=sflag, size = 0x4, offset = 0, fixed_abs, tag = 'sflag constant byte address 0x0 - dummy sync flag']
  #allocation21 [shape = 's32[]', space=sflag, size = 0x4, offset = 0, fixed_abs, tag = 'sflag constant byte address 0x0 - dummy sync flag']
  #allocation22 [shape = 's32[]', space=sflag, size = 0x4, offset = 0, fixed_abs, tag = 'sflag constant byte address 0x0 - dummy sync flag']
  #allocation23 [shape = 's32[]', space=sflag, size = 0x4, offset = 0, fixed_abs, tag = 'sflag constant byte address 0x0 - dummy sync flag']
  #allocation24 [shape = 's32[]', space=sflag, size = 0x4, offset = 0, fixed_abs, tag = 'sflag constant byte address 0x0 - dummy sync flag']
  #allocation25 [shape = 's32[]', space=sflag, size = 0x4, offset = 0, fixed_abs, tag = 'sflag constant byte address 0x0 - dummy sync flag']
  #allocation26 [shape = 's32[]', space=sflag, size = 0x4, offset = 0, fixed_abs, tag = 'sflag constant byte address 0x0 - dummy sync flag']
  #allocation27 [shape = 's32[]', space=sflag, size = 0x4, offset = 0, fixed_abs, tag = 'sflag constant byte address 0x0 - dummy sync flag']
  #allocation28 [shape = 's32[]', space=sflag, size = 0x4, offset = 0, fixed_abs, tag = 'sflag constant byte address 0x0 - dummy sync flag']
  #allocation29 [shape = 's32[]', space=sflag, size = 0x4, offset = 0, fixed_abs, tag = 'sflag constant byte address 0x0 - dummy sync flag']
  #allocation30 [shape = 's32[]', space=sflag, size = 0x4, offset = 0, fixed_abs, tag = 'sflag constant byte address 0x0 - dummy sync flag']
  #allocation31 [shape = 's32[]', space=sflag, size = 0x4, offset = 0, fixed_abs, tag = 'sflag constant byte address 0x0 - dummy sync flag']
  #allocation32 [shape = 's32[]', space=sflag, size = 0x4, offset = 0, fixed_abs, tag = 'sflag constant byte address 0x0 - dummy sync flag']
  #allocation33 [shape = 's32[]', space=sflag, size = 0x4, offset = 0, fixed_abs, tag = 'sflag constant byte address 0x0 - dummy sync flag']
  #allocation34 [shape = 's32[]', space=sflag, size = 0x4, offset = 0, fixed_abs, tag = 'sflag constant byte address 0x0 - dummy sync flag']
  #allocation35 [shape = 's32[]', space=sflag, size = 0x4, offset = 0, fixed_abs, tag = 'sflag constant byte address 0x0 - dummy sync flag']
  #allocation36 [shape = 's32[]', space=sflag, size = 0x4, offset = 0, fixed_abs, tag = 'sflag constant byte address 0x0 - dummy sync flag']
  #allocation37 [shape = 's32[]', space=sflag, size = 0x4, offset = 0, fixed_abs, tag = 'sflag constant byte address 0x0 - dummy sync flag']
  #allocation38 [shape = 's32[]', space=sflag, size = 0x4, offset = 0, fixed_abs, tag = 'sflag constant byte address 0x0 - dummy sync flag']
  #allocation39 [shape = 's32[]', space=sflag, size = 0x4, offset = 0, fixed_abs, tag = 'sflag constant byte address 0x0 - dummy sync flag']
  #allocation40 [shape = 's32[]', space=sflag, size = 0x4, offset = 0, fixed_abs, tag = 'sflag constant byte address 0x0 - dummy sync flag']
  #allocation41 [shape = 's32[]', space=sflag, size = 0x4, offset = 0, fixed_abs, tag = 'sflag constant byte address 0x0 - dummy sync flag']
  %s0 = inlined_call_operand.hbm [shape: s32[16], index: 0, kind: input, shape index: {}]
  %s1 = inlined_call_operand.hbm [shape: f32[16,128], index: 1, kind: input, shape index: {}]
  %s2 = inlined_call_operand.hbm [shape: f32[16,128], index: 2, kind: output, shape index: {}]
  %s3 = sld [smem:[#allocation0]]
  $region97: #{tpu_custom_call.1} parent=0
    _
  %s5 = ssub.s32 1, %s3
  %s6 = scalar_select 0, %s5, %s3
  %s8 = sshll.u32 %s0, 4
  %s9 = int_to_ptr.hbm [resolvable:$true] %s8
  %11 = dma.hbm_to_smem %s9, 16, [#allocation5], [#allocation4]
  %13 = dma.done [#allocation4], 16
  %14 = sfence
  $region1: #{tpu_custom_call.1} parent=0
    #allocation6 [shape = 'u8[8192]{0}', space=vmem, size = 0x2000, scoped, tag = 'output window, operand 0']
    #allocation7 [shape = 's32[2]{0}', space=sflag, size = 0x8, scoped, tag = 'scoped memory for tpu_custom_call.1']
    %15 = vsyncpa [#allocation7], 0
    %s16 = scalar_lea.sflag [#allocation7], 1
    %17 = vsyncpa %s16, 0
    loop: start=0, step=1, limit=3
    $region2: #{tpu_custom_call.1} parent=1 // loop_pre_header
      _
    $region3: #{tpu_custom_call.1} parent=1 // loop_header
      %s19 = sphi 0, %s23
      %p20 = scmp.ge.s32.totalorder %s19, 3
      %s28 = sphi 0, %s30
      %s31 = sphi 0, %s28
      %s41 = sphi 0, %s31
    $region4: #{tpu_custom_call.1} parent=1 // loop_header_branch
      %22 = sbr.rel (%p20) target = $region8
    $region5: #{tpu_custom_call.1} parent=1 // loop_body
      %s24 = ssub.s32 %s19, 1
      %s25 = sadd.s32 %s19, 1
      %s26 = ssub.s32 %s19, %s25
      %p27 = scmp.eq.s32.totalorder %s26, 0
      %s29 = sadd.s32 %s28, 1
      %s30 = scalar_select %p27, %s28, %s29
      %p32 = pneg %p27
      %p33 = scmp.eq.s32.totalorder %s19, 1
      %p34 = por %p32, %p33
      %p35 = scmp.ne.s32.totalorder %s28, %s31
      %p36 = scmp.eq.s32.totalorder %s19, 0
      %p37 = por %p35, %p36
      %p38 = scmp.ne.s32.totalorder %s28, %s31
      %p39 = scmp.eq.s32.totalorder %s24, 1
      %p40 = por %p38, %p39
      %p42 = scmp.ne.s32.totalorder %s31, %s41
      %p43 = scmp.eq.s32.totalorder %s24, 0
      %p44 = por %p42, %p43
      %p45 = scmp.lt.s32.totalorder %s19, 2
      // Predicated region
      $region9: #{tpu_custom_call.1} parent=5 // pred_check
        %p46 = pneg %p45
      $region10: #{tpu_custom_call.1} parent=5 // pred_check_branch
        %48 = sbr.rel (%p46) target = $region12
      $region11: #{tpu_custom_call.1} parent=5 // pred_region
        %p49 = pneg %p37
        %p50 = pneg %p34
        %s51 = sand.u32 %s28, 1
        %s52 = scalar_lea.sflag [#allocation7], %s51
        %s53 = sand.u32 %s28, 1
        %s54 = smul.addr %s53, 8
        %s55 = scalar_lea.vmem [#allocation6], %s54
        %p56 = scmp.lt.s32.totalorder %s19, 0
        %s57 = ssub.s32 0, %s19
        %s58 = scalar_select %p56, %s57, %s19
        %s59 = sand.u32 %s58, 1
        %s60 = ssub.s32 0, %s59
        %s61 = scalar_select %p56, %s60, %s59
        %p62 = scmp.eq.s32.totalorder %s19, 0
        // Predicated region
        $region13: #{tpu_custom_call.1} parent=11 // pred_check
          %p63 = pneg %p62
        $region14: #{tpu_custom_call.1} parent=11 // pred_check_branch
          %65 = sbr.rel (%p63) target = $region16
        $region15: #{tpu_custom_call.1} parent=11 // pred_region
          %s66 = sld [smem:[#allocation5]]
          %s67 = scalar_lea.hbm %s1, %s66
          // Predicated region
          $region17: #{tpu_custom_call.1} parent=15 // pred_check
            _
          $region18: #{tpu_custom_call.1} parent=15 // pred_check_branch
            %69 = sbr.rel target = $region20
          $region19: #{tpu_custom_call.1} parent=15 // pred_region
            %70 = sst [smem:[#allocation10]] [#allocation9]
            %71 = sst [smem:[#allocation11]] [#allocation8]
          $region20: #{tpu_custom_call.1} parent=15 // pred_fallthru
            _
          %73 = shalt.err (0)
          %s75 = sshll.u32 %s67, 4
          %s76 = int_to_ptr.hbm [resolvable:$true] %s75
          %s77 = sshll.u32 [#allocation2], 4
          %s78 = int_to_ptr.vmem [resolvable:$true] %s77
          %80 = dma.hbm_to_vmem [thread:$0]  %s76, 16, %s78, [#allocation3]
          %s81 = sld [smem:[#allocation5 + $0x1]]
          %s82 = scalar_lea.hbm %s1, %s81
          %s83 = scalar_lea.vmem [#allocation2], 1
          %s84 = scalar_lea.sflag [#allocation3], 1
          // Predicated region
          $region21: #{tpu_custom_call.1} parent=15 // pred_check
            _
          $region22: #{tpu_custom_call.1} parent=15 // pred_check_branch
            %86 = sbr.rel target = $region24
          $region23: #{tpu_custom_call.1} parent=15 // pred_region
            %87 = sst [smem:[#allocation10]] [#allocation13]
            %88 = sst [smem:[#allocation11]] [#allocation12]
          $region24: #{tpu_custom_call.1} parent=15 // pred_fallthru
            _
          %90 = shalt.err (0)
          %s92 = sshll.u32 %s82, 4
          %s93 = int_to_ptr.hbm [resolvable:$true] %s92
          %s94 = sshll.u32 %s83, 4
          %s95 = int_to_ptr.vmem [resolvable:$true] %s94
          %97 = dma.hbm_to_vmem [thread:$0]  %s93, 16, %s95, %s84
          %s98 = sld [smem:[#allocation5 + $0x2]]
          %s99 = scalar_lea.hbm %s1, %s98
          %s100 = scalar_lea.vmem [#allocation2], 2
          %s101 = scalar_lea.sflag [#allocation3], 2
          // Predicated region
          $region25: #{tpu_custom_call.1} parent=15 // pred_check
            _
          $region26: #{tpu_custom_call.1} parent=15 // pred_check_branch
            %103 = sbr.rel target = $region28
          $region27: #{tpu_custom_call.1} parent=15 // pred_region
            %104 = sst [smem:[#allocation10]] [#allocation15]
            %105 = sst [smem:[#allocation11]] [#allocation14]
          $region28: #{tpu_custom_call.1} parent=15 // pred_fallthru
            _
          %107 = shalt.err (0)
          %s109 = sshll.u32 %s99, 4
          %s110 = int_to_ptr.hbm [resolvable:$true] %s109
          %s111 = sshll.u32 %s100, 4
          %s112 = int_to_ptr.vmem [resolvable:$true] %s111
          %114 = dma.hbm_to_vmem [thread:$0]  %s110, 16, %s112, %s101
          %s115 = sld [smem:[#allocation5 + $0x3]]
          %s116 = scalar_lea.hbm %s1, %s115
          %s117 = scalar_lea.vmem [#allocation2], 3
          %s118 = scalar_lea.sflag [#allocation3], 3
          // Predicated region
          $region29: #{tpu_custom_call.1} parent=15 // pred_check
            _
          $region30: #{tpu_custom_call.1} parent=15 // pred_check_branch
            %120 = sbr.rel target = $region32
          $region31: #{tpu_custom_call.1} parent=15 // pred_region
            %121 = sst [smem:[#allocation10]] [#allocation17]
            %122 = sst [smem:[#allocation11]] [#allocation16]
          $region32: #{tpu_custom_call.1} parent=15 // pred_fallthru
            _
          %124 = shalt.err (0)
          %s126 = sshll.u32 %s116, 4
          %s127 = int_to_ptr.hbm [resolvable:$true] %s126
          %s128 = sshll.u32 %s117, 4
          %s129 = int_to_ptr.vmem [resolvable:$true] %s128
          %131 = dma.hbm_to_vmem [thread:$0]  %s127, 16, %s129, %s118
          %s132 = sld [smem:[#allocation5 + $0x4]]
          %s133 = scalar_lea.hbm %s1, %s132
          %s134 = scalar_lea.vmem [#allocation2], 4
          %s135 = scalar_lea.sflag [#allocation3], 4
          // Predicated region
          $region33: #{tpu_custom_call.1} parent=15 // pred_check
            _
          $region34: #{tpu_custom_call.1} parent=15 // pred_check_branch
            %137 = sbr.rel target = $region36
          $region35: #{tpu_custom_call.1} parent=15 // pred_region
            %138 = sst [smem:[#allocation10]] [#allocation19]
            %139 = sst [smem:[#allocation11]] [#allocation18]
          $region36: #{tpu_custom_call.1} parent=15 // pred_fallthru
            _
          %141 = shalt.err (0)
          %s143 = sshll.u32 %s133, 4
          %s144 = int_to_ptr.hbm [resolvable:$true] %s143
          %s145 = sshll.u32 %s134, 4
          %s146 = int_to_ptr.vmem [resolvable:$true] %s145
          %148 = dma.hbm_to_vmem [thread:$0]  %s144, 16, %s146, %s135
          %s149 = sld [smem:[#allocation5 + $0x5]]
          %s150 = scalar_lea.hbm %s1, %s149
          %s151 = scalar_lea.vmem [#allocation2], 5
          %s152 = scalar_lea.sflag [#allocation3], 5
          // Predicated region
          $region37: #{tpu_custom_call.1} parent=15 // pred_check
            _
          $region38: #{tpu_custom_call.1} parent=15 // pred_check_branch
            %154 = sbr.rel target = $region40
          $region39: #{tpu_custom_call.1} parent=15 // pred_region
            %155 = sst [smem:[#allocation10]] [#allocation21]
            %156 = sst [smem:[#allocation11]] [#allocation20]
          $region40: #{tpu_custom_call.1} parent=15 // pred_fallthru
            _
          %158 = shalt.err (0)
          %s160 = sshll.u32 %s150, 4
          %s161 = int_to_ptr.hbm [resolvable:$true] %s160
          %s162 = sshll.u32 %s151, 4
          %s163 = int_to_ptr.vmem [resolvable:$true] %s162
          %165 = dma.hbm_to_vmem [thread:$0]  %s161, 16, %s163, %s152
          %s166 = sld [smem:[#allocation5 + $0x6]]
          %s167 = scalar_lea.hbm %s1, %s166
          %s168 = scalar_lea.vmem [#allocation2], 6
          %s169 = scalar_lea.sflag [#allocation3], 6
          // Predicated region
          $region41: #{tpu_custom_call.1} parent=15 // pred_check
            _
          $region42: #{tpu_custom_call.1} parent=15 // pred_check_branch
            %171 = sbr.rel target = $region44
          $region43: #{tpu_custom_call.1} parent=15 // pred_region
            %172 = sst [smem:[#allocation10]] [#allocation23]
            %173 = sst [smem:[#allocation11]] [#allocation22]
          $region44: #{tpu_custom_call.1} parent=15 // pred_fallthru
            _
          %175 = shalt.err (0)
          %s177 = sshll.u32 %s167, 4
          %s178 = int_to_ptr.hbm [resolvable:$true] %s177
          %s179 = sshll.u32 %s168, 4
          %s180 = int_to_ptr.vmem [resolvable:$true] %s179
          %182 = dma.hbm_to_vmem [thread:$0]  %s178, 16, %s180, %s169
          %s183 = sld [smem:[#allocation5 + $0x7]]
          %s184 = scalar_lea.hbm %s1, %s183
          %s185 = scalar_lea.vmem [#allocation2], 7
          %s186 = scalar_lea.sflag [#allocation3], 7
          // Predicated region
          $region45: #{tpu_custom_call.1} parent=15 // pred_check
            _
          $region46: #{tpu_custom_call.1} parent=15 // pred_check_branch
            %188 = sbr.rel target = $region48
          $region47: #{tpu_custom_call.1} parent=15 // pred_region
            %189 = sst [smem:[#allocation10]] [#allocation25]
            %190 = sst [smem:[#allocation11]] [#allocation24]
          $region48: #{tpu_custom_call.1} parent=15 // pred_fallthru
            _
          %192 = shalt.err (0)
          %s194 = sshll.u32 %s184, 4
          %s195 = int_to_ptr.hbm [resolvable:$true] %s194
          %s196 = sshll.u32 %s185, 4
          %s197 = int_to_ptr.vmem [resolvable:$true] %s196
          %199 = dma.hbm_to_vmem [thread:$0]  %s195, 16, %s197, %s186
        $region16: #{tpu_custom_call.1} parent=11 // pred_fallthru
          _
        %s200 = sadd.s32 %s19, 1
        %p201 = scmp.lt.s32.totalorder %s200, 2
        // Predicated region
        $region49: #{tpu_custom_call.1} parent=11 // pred_check
          %p202 = pneg %p201
        $region50: #{tpu_custom_call.1} parent=11 // pred_check_branch
          %204 = sbr.rel (%p202) target = $region52
        $region51: #{tpu_custom_call.1} parent=11 // pred_region
          %s205 = ssub.s32 1, %s61
          %s206 = smul.u32 %s200, 8
          %s207 = sld [smem:[#allocation5 + %s206]]
          %s208 = scalar_lea.hbm %s1, %s207
          %s209 = smul.u32 %s205, 8
          %s210 = scalar_lea.vmem [#allocation2], %s209
          %s211 = scalar_lea.sflag [#allocation3], %s209
          // Predicated region
          $region53: #{tpu_custom_call.1} parent=51 // pred_check
            _
          $region54: #{tpu_custom_call.1} parent=51 // pred_check_branch
            %213 = sbr.rel target = $region56
          $region55: #{tpu_custom_call.1} parent=51 // pred_region
            %214 = sst [smem:[#allocation10]] [#allocation27]
            %215 = sst [smem:[#allocation11]] [#allocation26]
          $region56: #{tpu_custom_call.1} parent=51 // pred_fallthru
            _
          %217 = shalt.err (0)
          %s219 = sshll.u32 %s208, 4
          %s220 = int_to_ptr.hbm [resolvable:$true] %s219
          %s221 = sshll.u32 %s210, 4
          %s222 = int_to_ptr.vmem [resolvable:$true] %s221
          %224 = dma.hbm_to_vmem [thread:$0]  %s220, 16, %s222, %s211
          %s225 = sadd.s32 %s206, 1
          %s226 = sld [smem:[#allocation5 + %s225]]
          %s227 = scalar_lea.hbm %s1, %s226
          %s228 = sadd.s32 1, %s209
          %s229 = scalar_lea.vmem [#allocation2], %s228
          %s230 = scalar_lea.sflag [#allocation3], %s228
          // Predicated region
          $region57: #{tpu_custom_call.1} parent=51 // pred_check
            _
          $region58: #{tpu_custom_call.1} parent=51 // pred_check_branch
            %232 = sbr.rel target = $region60
          $region59: #{tpu_custom_call.1} parent=51 // pred_region
            %233 = sst [smem:[#allocation10]] [#allocation29]
            %234 = sst [smem:[#allocation11]] [#allocation28]
          $region60: #{tpu_custom_call.1} parent=51 // pred_fallthru
            _
          %236 = shalt.err (0)
          %s238 = sshll.u32 %s227, 4
          %s239 = int_to_ptr.hbm [resolvable:$true] %s238
          %s240 = sshll.u32 %s229, 4
          %s241 = int_to_ptr.vmem [resolvable:$true] %s240
          %243 = dma.hbm_to_vmem [thread:$0]  %s239, 16, %s241, %s230
          %s244 = sadd.s32 %s206, 2
          %s245 = sld [smem:[#allocation5 + %s244]]
          %s246 = scalar_lea.hbm %s1, %s245
          %s247 = sadd.s32 2, %s209
          %s248 = scalar_lea.vmem [#allocation2], %s247
          %s249 = scalar_lea.sflag [#allocation3], %s247
          // Predicated region
          $region61: #{tpu_custom_call.1} parent=51 // pred_check
            _
          $region62: #{tpu_custom_call.1} parent=51 // pred_check_branch
            %251 = sbr.rel target = $region64
          $region63: #{tpu_custom_call.1} parent=51 // pred_region
            %252 = sst [smem:[#allocation10]] [#allocation31]
            %253 = sst [smem:[#allocation11]] [#allocation30]
          $region64: #{tpu_custom_call.1} parent=51 // pred_fallthru
            _
          %255 = shalt.err (0)
          %s257 = sshll.u32 %s246, 4
          %s258 = int_to_ptr.hbm [resolvable:$true] %s257
          %s259 = sshll.u32 %s248, 4
          %s260 = int_to_ptr.vmem [resolvable:$true] %s259
          %262 = dma.hbm_to_vmem [thread:$0]  %s258, 16, %s260, %s249
          %s263 = sadd.s32 %s206, 3
          %s264 = sld [smem:[#allocation5 + %s263]]
          %s265 = scalar_lea.hbm %s1, %s264
          %s266 = sadd.s32 3, %s209
          %s267 = scalar_lea.vmem [#allocation2], %s266
          %s268 = scalar_lea.sflag [#allocation3], %s266
          // Predicated region
          $region65: #{tpu_custom_call.1} parent=51 // pred_check
            _
          $region66: #{tpu_custom_call.1} parent=51 // pred_check_branch
            %270 = sbr.rel target = $region68
          $region67: #{tpu_custom_call.1} parent=51 // pred_region
            %271 = sst [smem:[#allocation10]] [#allocation33]
            %272 = sst [smem:[#allocation11]] [#allocation32]
          $region68: #{tpu_custom_call.1} parent=51 // pred_fallthru
            _
          %274 = shalt.err (0)
          %s276 = sshll.u32 %s265, 4
          %s277 = int_to_ptr.hbm [resolvable:$true] %s276
          %s278 = sshll.u32 %s267, 4
          %s279 = int_to_ptr.vmem [resolvable:$true] %s278
          %281 = dma.hbm_to_vmem [thread:$0]  %s277, 16, %s279, %s268
          %s282 = sadd.s32 %s206, 4
          %s283 = sld [smem:[#allocation5 + %s282]]
          %s284 = scalar_lea.hbm %s1, %s283
          %s285 = sadd.s32 4, %s209
          %s286 = scalar_lea.vmem [#allocation2], %s285
          %s287 = scalar_lea.sflag [#allocation3], %s285
          // Predicated region
          $region69: #{tpu_custom_call.1} parent=51 // pred_check
            _
          $region70: #{tpu_custom_call.1} parent=51 // pred_check_branch
            %289 = sbr.rel target = $region72
          $region71: #{tpu_custom_call.1} parent=51 // pred_region
            %290 = sst [smem:[#allocation10]] [#allocation35]
            %291 = sst [smem:[#allocation11]] [#allocation34]
          $region72: #{tpu_custom_call.1} parent=51 // pred_fallthru
            _
          %293 = shalt.err (0)
          %s295 = sshll.u32 %s284, 4
          %s296 = int_to_ptr.hbm [resolvable:$true] %s295
          %s297 = sshll.u32 %s286, 4
          %s298 = int_to_ptr.vmem [resolvable:$true] %s297
          %300 = dma.hbm_to_vmem [thread:$0]  %s296, 16, %s298, %s287
          %s301 = sadd.s32 %s206, 5
          %s302 = sld [smem:[#allocation5 + %s301]]
          %s303 = scalar_lea.hbm %s1, %s302
          %s304 = sadd.s32 5, %s209
          %s305 = scalar_lea.vmem [#allocation2], %s304
          %s306 = scalar_lea.sflag [#allocation3], %s304
          // Predicated region
          $region73: #{tpu_custom_call.1} parent=51 // pred_check
            _
          $region74: #{tpu_custom_call.1} parent=51 // pred_check_branch
            %308 = sbr.rel target = $region76
          $region75: #{tpu_custom_call.1} parent=51 // pred_region
            %309 = sst [smem:[#allocation10]] [#allocation37]
            %310 = sst [smem:[#allocation11]] [#allocation36]
          $region76: #{tpu_custom_call.1} parent=51 // pred_fallthru
            _
          %312 = shalt.err (0)
          %s314 = sshll.u32 %s303, 4
          %s315 = int_to_ptr.hbm [resolvable:$true] %s314
          %s316 = sshll.u32 %s305, 4
          %s317 = int_to_ptr.vmem [resolvable:$true] %s316
          %319 = dma.hbm_to_vmem [thread:$0]  %s315, 16, %s317, %s306
          %s320 = sadd.s32 %s206, 6
          %s321 = sld [smem:[#allocation5 + %s320]]
          %s322 = scalar_lea.hbm %s1, %s321
          %s323 = sadd.s32 6, %s209
          %s324 = scalar_lea.vmem [#allocation2], %s323
          %s325 = scalar_lea.sflag [#allocation3], %s323
          // Predicated region
          $region77: #{tpu_custom_call.1} parent=51 // pred_check
            _
          $region78: #{tpu_custom_call.1} parent=51 // pred_check_branch
            %327 = sbr.rel target = $region80
          $region79: #{tpu_custom_call.1} parent=51 // pred_region
            %328 = sst [smem:[#allocation10]] [#allocation39]
            %329 = sst [smem:[#allocation11]] [#allocation38]
          $region80: #{tpu_custom_call.1} parent=51 // pred_fallthru
            _
          %331 = shalt.err (0)
          %s333 = sshll.u32 %s322, 4
          %s334 = int_to_ptr.hbm [resolvable:$true] %s333
          %s335 = sshll.u32 %s324, 4
          %s336 = int_to_ptr.vmem [resolvable:$true] %s335
          %338 = dma.hbm_to_vmem [thread:$0]  %s334, 16, %s336, %s325
          %s339 = sadd.s32 %s206, 7
          %s340 = sld [smem:[#allocation5 + %s339]]
          %s341 = scalar_lea.hbm %s1, %s340
          %s342 = sadd.s32 7, %s209
          %s343 = scalar_lea.vmem [#allocation2], %s342
          %s344 = scalar_lea.sflag [#allocation3], %s342
          // Predicated region
          $region81: #{tpu_custom_call.1} parent=51 // pred_check
            _
          $region82: #{tpu_custom_call.1} parent=51 // pred_check_branch
            %346 = sbr.rel target = $region84
          $region83: #{tpu_custom_call.1} parent=51 // pred_region
            %347 = sst [smem:[#allocation10]] [#allocation41]
            %348 = sst [smem:[#allocation11]] [#allocation40]
          $region84: #{tpu_custom_call.1} parent=51 // pred_fallthru
            _
          %350 = shalt.err (0)
          %s352 = sshll.u32 %s341, 4
          %s353 = int_to_ptr.hbm [resolvable:$true] %s352
          %s354 = sshll.u32 %s343, 4
          %s355 = int_to_ptr.vmem [resolvable:$true] %s354
          %357 = dma.hbm_to_vmem [thread:$0]  %s353, 16, %s355, %s344
        $region52: #{tpu_custom_call.1} parent=11 // pred_fallthru
          _
        %s358 = smul.u32 %s61, 8
        %s359 = scalar_lea.sflag [#allocation3], %s358
        %361 = dma.done %s359, 16
        %s362 = sadd.s32 1, %s358
        %s363 = scalar_lea.sflag [#allocation3], %s362
        %365 = dma.done %s363, 16
        %s366 = sadd.s32 2, %s358
        %s367 = scalar_lea.sflag [#allocation3], %s366
        %369 = dma.done %s367, 16
        %s370 = sadd.s32 3, %s358
        %s371 = scalar_lea.sflag [#allocation3], %s370
        %373 = dma.done %s371, 16
        %s374 = sadd.s32 4, %s358
        %s375 = scalar_lea.sflag [#allocation3], %s374
        %377 = dma.done %s375, 16
        %s378 = sadd.s32 5, %s358
        %s379 = scalar_lea.sflag [#allocation3], %s378
        %381 = dma.done %s379, 16
        %s382 = sadd.s32 6, %s358
        %s383 = scalar_lea.sflag [#allocation3], %s382
        %385 = dma.done %s383, 16
        %s386 = sadd.s32 7, %s358
        %s387 = scalar_lea.sflag [#allocation3], %s386
        %389 = dma.done %s387, 16
        %s390 = scalar_lea.vmem [#allocation2], %s358
        %v391 = vld [vmem:[%s390] sm:$0xff]
        %392 = vst [vmem:[%s55] sm:$0xff] %v391
        %s393 = sand.u32 %s28, 1
        %s394 = scalar_lea.sflag [#allocation7], %s393
        %s395 = sand.u32 %s28, 1
        %s396 = smul.addr %s395, 8
        %s397 = scalar_lea.vmem [#allocation6], %s396
        // Predicated region
        $region85: #{tpu_custom_call.1} parent=11 // pred_check
          %p398 = pneg %p34
        $region86: #{tpu_custom_call.1} parent=11 // pred_check_branch
          %400 = sbr.rel (%p398) target = $region88
        $region87: #{tpu_custom_call.1} parent=11 // pred_region
          %402 = vsyncadd %s394, 0
          %s403 = smul.addr %s19, 8
          %s404 = scalar_lea.hbm %s2, %s403
          %s406 = sshll.u32 %s397, 4
          %s407 = int_to_ptr.vmem [resolvable:$true] %s406
          %s408 = sshll.u32 %s404, 4
          %s409 = int_to_ptr.hbm [resolvable:$true] %s408
          %411 = dma.vmem_to_hbm [thread:$0]  %s407, 128, %s409, %s394
        $region88: #{tpu_custom_call.1} parent=11 // pred_fallthru
          _
      $region12: #{tpu_custom_call.1} parent=5 // pred_fallthru
        _
      %p412 = scmp.le.s32.totalorder 1, %s19
      // Predicated region
      $region89: #{tpu_custom_call.1} parent=5 // pred_check
        %p413 = pneg %p412
      $region90: #{tpu_custom_call.1} parent=5 // pred_check_branch
        %415 = sbr.rel (%p413) target = $region92
      $region91: #{tpu_custom_call.1} parent=5 // pred_region
        %s416 = ssub.s32 %s19, 1
        // Predicated region
        $region93: #{tpu_custom_call.1} parent=91 // pred_check
          %p417 = pneg %p40
        $region94: #{tpu_custom_call.1} parent=91 // pred_check_branch
          %419 = sbr.rel (%p417) target = $region96
        $region95: #{tpu_custom_call.1} parent=91 // pred_region
          %s420 = sand.u32 %s31, 1
          %s421 = scalar_lea.sflag [#allocation7], %s420
          %s422 = sand.u32 %s31, 1
          %s423 = smul.addr %s422, 8
          %s424 = scalar_lea.vmem [#allocation6], %s423
          %426 = dma.done %s421, 128
        $region96: #{tpu_custom_call.1} parent=91 // pred_fallthru
          _
      $region92: #{tpu_custom_call.1} parent=5 // pred_fallthru
        _
    $region6: #{tpu_custom_call.1} parent=1 // loop_footer
      %s23 = sadd.s32 1, %s19
    $region7: #{tpu_custom_call.1} parent=1 // loop_footer_branch
      %18 = sbr.rel target = $region3
    $region8: #{tpu_custom_call.1} parent=1 // loop_exit
      _
    %427 = vsyncpa [#allocation7], 1
    %s428 = scalar_lea.sflag [#allocation7], 1
    %429 = vsyncpa %s428, 1
  %430 = vsyncmov [#allocation3]
  %s431 = vpop.sfrf %430
  %p432 = scmp.eq.s32.totalorder %s431, 0
  %p433 = pneg %p432
  %435 = shalt.err (%p433)
  %s436 = scalar_lea.sflag [#allocation3], 1
  %437 = vsyncmov %s436
  %s438 = vpop.sfrf %437
  %p439 = scmp.eq.s32.totalorder %s438, 0
  %p440 = pneg %p439
  %442 = shalt.err (%p440)
  %s443 = scalar_lea.sflag [#allocation3], 2
  %444 = vsyncmov %s443
  %s445 = vpop.sfrf %444
  %p446 = scmp.eq.s32.totalorder %s445, 0
  %p447 = pneg %p446
  %449 = shalt.err (%p447)
  %s450 = scalar_lea.sflag [#allocation3], 3
  %451 = vsyncmov %s450
  %s452 = vpop.sfrf %451
  %p453 = scmp.eq.s32.totalorder %s452, 0
  %p454 = pneg %p453
  %456 = shalt.err (%p454)
  %s457 = scalar_lea.sflag [#allocation3], 4
  %458 = vsyncmov %s457
  %s459 = vpop.sfrf %458
  %p460 = scmp.eq.s32.totalorder %s459, 0
  %p461 = pneg %p460
  %463 = shalt.err (%p461)
  %s464 = scalar_lea.sflag [#allocation3], 5
  %465 = vsyncmov %s464
  %s466 = vpop.sfrf %465
  %p467 = scmp.eq.s32.totalorder %s466, 0
  %p468 = pneg %p467
  %470 = shalt.err (%p468)
  %s471 = scalar_lea.sflag [#allocation3], 6
  %472 = vsyncmov %s471
  %s473 = vpop.sfrf %472
  %p474 = scmp.eq.s32.totalorder %s473, 0
  %p475 = pneg %p474
  %477 = shalt.err (%p475)
  %s478 = scalar_lea.sflag [#allocation3], 7
  %479 = vsyncmov %s478
  %s480 = vpop.sfrf %479
  %p481 = scmp.eq.s32.totalorder %s480, 0
  %p482 = pneg %p481
  %484 = shalt.err (%p482)
  %s485 = scalar_lea.sflag [#allocation3], 8
  %486 = vsyncmov %s485
  %s487 = vpop.sfrf %486
  %p488 = scmp.eq.s32.totalorder %s487, 0
  %p489 = pneg %p488
  %491 = shalt.err (%p489)
  %s492 = scalar_lea.sflag [#allocation3], 9
  %493 = vsyncmov %s492
  %s494 = vpop.sfrf %493
  %p495 = scmp.eq.s32.totalorder %s494, 0
  %p496 = pneg %p495
  %498 = shalt.err (%p496)
  %s499 = scalar_lea.sflag [#allocation3], 10
  %500 = vsyncmov %s499
  %s501 = vpop.sfrf %500
  %p502 = scmp.eq.s32.totalorder %s501, 0
  %p503 = pneg %p502
  %505 = shalt.err (%p503)
  %s506 = scalar_lea.sflag [#allocation3], 11
  %507 = vsyncmov %s506
  %s508 = vpop.sfrf %507
  %p509 = scmp.eq.s32.totalorder %s508, 0
  %p510 = pneg %p509
  %512 = shalt.err (%p510)
  %s513 = scalar_lea.sflag [#allocation3], 12
  %514 = vsyncmov %s513
  %s515 = vpop.sfrf %514
  %p516 = scmp.eq.s32.totalorder %s515, 0
  %p517 = pneg %p516
  %519 = shalt.err (%p517)
  %s520 = scalar_lea.sflag [#allocation3], 13
  %521 = vsyncmov %s520
  %s522 = vpop.sfrf %521
  %p523 = scmp.eq.s32.totalorder %s522, 0
  %p524 = pneg %p523
  %526 = shalt.err (%p524)
  %s527 = scalar_lea.sflag [#allocation3], 14
  %528 = vsyncmov %s527
  %s529 = vpop.sfrf %528
  %p530 = scmp.eq.s32.totalorder %s529, 0
  %p531 = pneg %p530
  %533 = shalt.err (%p531)
  %s534 = scalar_lea.sflag [#allocation3], 15
  %535 = vsyncmov %s534
  %s536 = vpop.sfrf %535
  %p537 = scmp.eq.s32.totalorder %s536, 0
  %p538 = pneg %p537
  %540 = shalt.err (%p538)

</llo_original>
